<compile_context>
chip_gen: v7x
topology: tpu7x:2x2x1
jax: 0.10.0
libtpu: 0.0.40
codegen_flags: <defaults>
</compile_context>

<pallas_src>
import functools

import jax
import jax.numpy as jnp
from jax.experimental import pallas as pl
from jax.experimental.pallas import tpu as pltpu


def _sa_enhance_kernel(x_ref, w_ref, o_ref, *, ksize: int):
    # x_ref: (1, C, H, W) VMEM block (one batch element)
    # w_ref: (ksize*ksize,) f32 in SMEM  (row-major flattened conv weight)
    # o_ref: (1, 1, H, W)  VMEM output block
    _, C, H, W = x_ref.shape
    pad = (ksize - 1) // 2

    # ---- 1) channel-wise max (torch.max(x, dim=1)) -------------------------
    # Unrolled elementwise maximum over (H, W) slices -> robust VPU-only lowering.
    m = x_ref[0, 0].astype(jnp.float32)
    for c in range(1, C):
        m = jnp.maximum(m, x_ref[0, c].astype(jnp.float32))          # (H, W)

    # ---- 2) "same" zero padding, built with concatenates -------------------
    zrow = jnp.zeros((pad, W), jnp.float32)
    mp = jnp.concatenate([zrow, m, zrow], axis=0)                     # (H+2p, W)
    zcol = jnp.zeros((H + 2 * pad, pad), jnp.float32)
    mp = jnp.concatenate([zcol, mp, zcol], axis=1)                    # (H+2p, W+2p)

    # ---- 3) k x k single-channel cross-correlation, unrolled over taps -----
    acc = jnp.zeros((H, W), jnp.float32)
    for dy in range(ksize):
        row = jax.lax.slice(mp, (dy, 0), (dy + H, W + 2 * pad))       # (H, W+2p)
        for dx in range(ksize):
            win = jax.lax.slice(row, (0, dx), (H, dx + W))            # (H, W)
            acc = acc + w_ref[dy * ksize + dx] * win

    # ---- 4) sigmoid, cast back ---------------------------------------------
    y = 1.0 / (1.0 + jnp.exp(-acc))
    o_ref[0, 0] = y.astype(o_ref.dtype)


def sa_enhance(x, weight):
    """Pallas TPU forward of SA_Enhance: sigmoid(conv2d(max_c(x), w, padding='same')).

    x:      (N, C, H, W)
    weight: (k, k) or (1, 1, k, k) conv weight, k in {3, 7}
    returns (N, 1, H, W) in x.dtype
    """
    N, C, H, W = x.shape
    w = jnp.asarray(weight, jnp.float32).reshape(-1)
    ksize = int(round(float(w.size) ** 0.5))
    assert ksize * ksize == w.size and ksize in (3, 7), "kernel size must be 3 or 7"

    kernel = functools.partial(_sa_enhance_kernel, ksize=ksize)

    # NOTE: for very large C*H*W per image one would additionally tile C as an
    # "arbitrary" grid reduction axis (running max in a VMEM scratch); for typical
    # SA_Enhance feature maps a whole (C, H, W) image fits comfortably in VMEM.
    return pl.pallas_call(
        kernel,
        out_shape=jax.ShapeDtypeStruct((N, 1, H, W), x.dtype),
        grid_spec=pltpu.PrefetchScalarGridSpec(
            num_scalar_prefetch=0,
            grid=(N,),
            in_specs=[
                pl.BlockSpec((1, C, H, W), lambda n: (n, 0, 0, 0)),
                pl.BlockSpec(memory_space=pltpu.MemorySpace.SMEM),
            ],
            out_specs=pl.BlockSpec((1, 1, H, W), lambda n: (n, 0, 0, 0)),
        ),
        compiler_params=pltpu.CompilerParams(
            dimension_semantics=("parallel",)),
    )(x, w)


def sa_enhance_ref(x, weight):
    """Pure-JAX reference (XLA conv) for correctness checking."""
    ksize = int(weight.shape[-1])
    pad = (ksize - 1) // 2
    m = jnp.max(x.astype(jnp.float32), axis=1, keepdims=True)          # (N,1,H,W)
    w = jnp.asarray(weight, jnp.float32).reshape(1, 1, ksize, ksize)
    y = jax.lax.conv_general_dilated(
        m, w,
        window_strides=(1, 1),
        padding=((pad, pad), (pad, pad)),
        dimension_numbers=("NCHW", "OIHW", "NCHW"),
        precision=jax.lax.Precision.HIGHEST)
    return jax.nn.sigmoid(y).astype(x.dtype)


if __name__ == "__main__":
    key = jax.random.PRNGKey(0)
    kx, kw = jax.random.split(key)

    # NCHW input, matching the PyTorch module's usage.
    x = jax.random.normal(kx, (2, 4, 16, 16), dtype=jnp.float32)
    # conv1 weight of SA_Enhance: Conv2d(1, 1, kernel_size=7, padding=3, bias=False)
    weight = jax.random.normal(kw, (7, 7), dtype=jnp.float32) * 0.1

    out = jax.block_until_ready(sa_enhance(x, weight))
    ref = jax.block_until_ready(sa_enhance_ref(x, weight))

    assert out.shape == (2, 1, 16, 16) and out.dtype == x.dtype
    max_err = float(jnp.max(jnp.abs(out - ref)))
    assert jnp.allclose(out, ref, atol=1e-5, rtol=1e-5), f"mismatch vs reference: {max_err}"

    print("KERNEL_OK")
</pallas_src>

<mosaic_0001>
module attributes {stable_mosaic.version = 11 : i64} {
  func.func @_sa_enhance_kernel(%arg0: i32, %arg1: memref<1x4x16x16xf32, #tpu.memory_space<vmem>>, %arg2: memref<49xf32, #tpu.memory_space<smem>>, %arg3: memref<1x1x16x16xf32, #tpu.memory_space<vmem>>) attributes {dimension_semantics = [#tpu.dimension_semantics<parallel>], iteration_bounds = array<i64: 2>, scalar_prefetch = 0 : i64, scratch_operands = 0 : i64, tpu.core_type = #tpu.core_type<tc>, window_params = [{transform_indices = @transform_0, window_bounds = array<i64: 1, 4, 16, 16>}, {transform_indices = @transform_1, window_bounds = array<i64: 49>}, {transform_indices = @transform_2, window_bounds = array<i64: 1, 1, 16, 16>}]} {
    %c0 = arith.constant 0 : index
    %c0_0 = arith.constant 0 : index
    %c0_1 = arith.constant 0 : index
    %c0_2 = arith.constant 0 : index
    %0 = vector.load %arg1[%c0, %c0_0, %c0_1, %c0_2] : memref<1x4x16x16xf32, #tpu.memory_space<vmem>>, vector<1x1x16x16xf32>
    %1 = vector.shape_cast %0 : vector<1x1x16x16xf32> to vector<16x16xf32>
    %c0_3 = arith.constant 0 : index
    %c1 = arith.constant 1 : index
    %c0_4 = arith.constant 0 : index
    %c0_5 = arith.constant 0 : index
    %2 = vector.load %arg1[%c0_3, %c1, %c0_4, %c0_5] : memref<1x4x16x16xf32, #tpu.memory_space<vmem>>, vector<1x1x16x16xf32>
    %3 = vector.shape_cast %2 : vector<1x1x16x16xf32> to vector<16x16xf32>
    %4 = arith.maximumf %1, %3 : vector<16x16xf32>
    %c0_6 = arith.constant 0 : index
    %c2 = arith.constant 2 : index
    %c0_7 = arith.constant 0 : index
    %c0_8 = arith.constant 0 : index
    %5 = vector.load %arg1[%c0_6, %c2, %c0_7, %c0_8] : memref<1x4x16x16xf32, #tpu.memory_space<vmem>>, vector<1x1x16x16xf32>
    %6 = vector.shape_cast %5 : vector<1x1x16x16xf32> to vector<16x16xf32>
    %7 = arith.maximumf %4, %6 : vector<16x16xf32>
    %c0_9 = arith.constant 0 : index
    %c3 = arith.constant 3 : index
    %c0_10 = arith.constant 0 : index
    %c0_11 = arith.constant 0 : index
    %8 = vector.load %arg1[%c0_9, %c3, %c0_10, %c0_11] : memref<1x4x16x16xf32, #tpu.memory_space<vmem>>, vector<1x1x16x16xf32>
    %9 = vector.shape_cast %8 : vector<1x1x16x16xf32> to vector<16x16xf32>
    %10 = arith.maximumf %7, %9 : vector<16x16xf32>
    %cst = arith.constant 0.000000e+00 : f32
    %11 = vector.broadcast %cst : f32 to vector<3x16xf32>
    %12 = tpu.concatenate %11, %10, %11 in 0 : vector<3x16xf32>, vector<16x16xf32>, vector<3x16xf32> -> vector<22x16xf32>
    %cst_12 = arith.constant 0.000000e+00 : f32
    %13 = vector.broadcast %cst_12 : f32 to vector<22x3xf32>
    %14 = tpu.concatenate %13, %12, %13 in 1 : vector<22x3xf32>, vector<22x16xf32>, vector<22x3xf32> -> vector<22x22xf32>
    %cst_13 = arith.constant 0.000000e+00 : f32
    %15 = vector.broadcast %cst_13 : f32 to vector<16x16xf32>
    %16 = vector.extract_strided_slice %14 {offsets = [0, 0], sizes = [16, 22], strides = [1, 1]} : vector<22x22xf32> to vector<16x22xf32>
    %17 = vector.extract_strided_slice %16 {offsets = [0, 0], sizes = [16, 16], strides = [1, 1]} : vector<16x22xf32> to vector<16x16xf32>
    %c0_14 = arith.constant 0 : index
    %18 = memref.load %arg2[%c0_14] : memref<49xf32, #tpu.memory_space<smem>>
    %19 = vector.broadcast %18 : f32 to vector<16x16xf32>
    %20 = arith.mulf %19, %17 : vector<16x16xf32>
    %21 = arith.addf %15, %20 : vector<16x16xf32>
    %22 = vector.extract_strided_slice %16 {offsets = [0, 1], sizes = [16, 16], strides = [1, 1]} : vector<16x22xf32> to vector<16x16xf32>
    %c1_15 = arith.constant 1 : index
    %23 = memref.load %arg2[%c1_15] : memref<49xf32, #tpu.memory_space<smem>>
    %24 = vector.broadcast %23 : f32 to vector<16x16xf32>
    %25 = arith.mulf %24, %22 : vector<16x16xf32>
    %26 = arith.addf %21, %25 : vector<16x16xf32>
    %27 = vector.extract_strided_slice %16 {offsets = [0, 2], sizes = [16, 16], strides = [1, 1]} : vector<16x22xf32> to vector<16x16xf32>
    %c2_16 = arith.constant 2 : index
    %28 = memref.load %arg2[%c2_16] : memref<49xf32, #tpu.memory_space<smem>>
    %29 = vector.broadcast %28 : f32 to vector<16x16xf32>
    %30 = arith.mulf %29, %27 : vector<16x16xf32>
    %31 = arith.addf %26, %30 : vector<16x16xf32>
    %32 = vector.extract_strided_slice %16 {offsets = [0, 3], sizes = [16, 16], strides = [1, 1]} : vector<16x22xf32> to vector<16x16xf32>
    %c3_17 = arith.constant 3 : index
    %33 = memref.load %arg2[%c3_17] : memref<49xf32, #tpu.memory_space<smem>>
    %34 = vector.broadcast %33 : f32 to vector<16x16xf32>
    %35 = arith.mulf %34, %32 : vector<16x16xf32>
    %36 = arith.addf %31, %35 : vector<16x16xf32>
    %37 = vector.extract_strided_slice %16 {offsets = [0, 4], sizes = [16, 16], strides = [1, 1]} : vector<16x22xf32> to vector<16x16xf32>
    %c4 = arith.constant 4 : index
    %38 = memref.load %arg2[%c4] : memref<49xf32, #tpu.memory_space<smem>>
    %39 = vector.broadcast %38 : f32 to vector<16x16xf32>
    %40 = arith.mulf %39, %37 : vector<16x16xf32>
    %41 = arith.addf %36, %40 : vector<16x16xf32>
    %42 = vector.extract_strided_slice %16 {offsets = [0, 5], sizes = [16, 16], strides = [1, 1]} : vector<16x22xf32> to vector<16x16xf32>
    %c5 = arith.constant 5 : index
    %43 = memref.load %arg2[%c5] : memref<49xf32, #tpu.memory_space<smem>>
    %44 = vector.broadcast %43 : f32 to vector<16x16xf32>
    %45 = arith.mulf %44, %42 : vector<16x16xf32>
    %46 = arith.addf %41, %45 : vector<16x16xf32>
    %47 = vector.extract_strided_slice %16 {offsets = [0, 6], sizes = [16, 16], strides = [1, 1]} : vector<16x22xf32> to vector<16x16xf32>
    %c6 = arith.constant 6 : index
    %48 = memref.load %arg2[%c6] : memref<49xf32, #tpu.memory_space<smem>>
    %49 = vector.broadcast %48 : f32 to vector<16x16xf32>
    %50 = arith.mulf %49, %47 : vector<16x16xf32>
    %51 = arith.addf %46, %50 : vector<16x16xf32>
    %52 = vector.extract_strided_slice %14 {offsets = [1, 0], sizes = [16, 22], strides = [1, 1]} : vector<22x22xf32> to vector<16x22xf32>
    %53 = vector.extract_strided_slice %52 {offsets = [0, 0], sizes = [16, 16], strides = [1, 1]} : vector<16x22xf32> to vector<16x16xf32>
    %c7 = arith.constant 7 : index
    %54 = memref.load %arg2[%c7] : memref<49xf32, #tpu.memory_space<smem>>
    %55 = vector.broadcast %54 : f32 to vector<16x16xf32>
    %56 = arith.mulf %55, %53 : vector<16x16xf32>
    %57 = arith.addf %51, %56 : vector<16x16xf32>
    %58 = vector.extract_strided_slice %52 {offsets = [0, 1], sizes = [16, 16], strides = [1, 1]} : vector<16x22xf32> to vector<16x16xf32>
    %c8 = arith.constant 8 : index
    %59 = memref.load %arg2[%c8] : memref<49xf32, #tpu.memory_space<smem>>
    %60 = vector.broadcast %59 : f32 to vector<16x16xf32>
    %61 = arith.mulf %60, %58 : vector<16x16xf32>
    %62 = arith.addf %57, %61 : vector<16x16xf32>
    %63 = vector.extract_strided_slice %52 {offsets = [0, 2], sizes = [16, 16], strides = [1, 1]} : vector<16x22xf32> to vector<16x16xf32>
    %c9 = arith.constant 9 : index
    %64 = memref.load %arg2[%c9] : memref<49xf32, #tpu.memory_space<smem>>
    %65 = vector.broadcast %64 : f32 to vector<16x16xf32>
    %66 = arith.mulf %65, %63 : vector<16x16xf32>
    %67 = arith.addf %62, %66 : vector<16x16xf32>
    %68 = vector.extract_strided_slice %52 {offsets = [0, 3], sizes = [16, 16], strides = [1, 1]} : vector<16x22xf32> to vector<16x16xf32>
    %c10 = arith.constant 10 : index
    %69 = memref.load %arg2[%c10] : memref<49xf32, #tpu.memory_space<smem>>
    %70 = vector.broadcast %69 : f32 to vector<16x16xf32>
    %71 = arith.mulf %70, %68 : vector<16x16xf32>
    %72 = arith.addf %67, %71 : vector<16x16xf32>
    %73 = vector.extract_strided_slice %52 {offsets = [0, 4], sizes = [16, 16], strides = [1, 1]} : vector<16x22xf32> to vector<16x16xf32>
    %c11 = arith.constant 11 : index
    %74 = memref.load %arg2[%c11] : memref<49xf32, #tpu.memory_space<smem>>
    %75 = vector.broadcast %74 : f32 to vector<16x16xf32>
    %76 = arith.mulf %75, %73 : vector<16x16xf32>
    %77 = arith.addf %72, %76 : vector<16x16xf32>
    %78 = vector.extract_strided_slice %52 {offsets = [0, 5], sizes = [16, 16], strides = [1, 1]} : vector<16x22xf32> to vector<16x16xf32>
    %c12 = arith.constant 12 : index
    %79 = memref.load %arg2[%c12] : memref<49xf32, #tpu.memory_space<smem>>
    %80 = vector.broadcast %79 : f32 to vector<16x16xf32>
    %81 = arith.mulf %80, %78 : vector<16x16xf32>
    %82 = arith.addf %77, %81 : vector<16x16xf32>
    %83 = vector.extract_strided_slice %52 {offsets = [0, 6], sizes = [16, 16], strides = [1, 1]} : vector<16x22xf32> to vector<16x16xf32>
    %c13 = arith.constant 13 : index
    %84 = memref.load %arg2[%c13] : memref<49xf32, #tpu.memory_space<smem>>
    %85 = vector.broadcast %84 : f32 to vector<16x16xf32>
    %86 = arith.mulf %85, %83 : vector<16x16xf32>
    %87 = arith.addf %82, %86 : vector<16x16xf32>
    %88 = vector.extract_strided_slice %14 {offsets = [2, 0], sizes = [16, 22], strides = [1, 1]} : vector<22x22xf32> to vector<16x22xf32>
    %89 = vector.extract_strided_slice %88 {offsets = [0, 0], sizes = [16, 16], strides = [1, 1]} : vector<16x22xf32> to vector<16x16xf32>
    %c14 = arith.constant 14 : index
    %90 = memref.load %arg2[%c14] : memref<49xf32, #tpu.memory_space<smem>>
    %91 = vector.broadcast %90 : f32 to vector<16x16xf32>
    %92 = arith.mulf %91, %89 : vector<16x16xf32>
    %93 = arith.addf %87, %92 : vector<16x16xf32>
    %94 = vector.extract_strided_slice %88 {offsets = [0, 1], sizes = [16, 16], strides = [1, 1]} : vector<16x22xf32> to vector<16x16xf32>
    %c15 = arith.constant 15 : index
    %95 = memref.load %arg2[%c15] : memref<49xf32, #tpu.memory_space<smem>>
    %96 = vector.broadcast %95 : f32 to vector<16x16xf32>
    %97 = arith.mulf %96, %94 : vector<16x16xf32>
    %98 = arith.addf %93, %97 : vector<16x16xf32>
    %99 = vector.extract_strided_slice %88 {offsets = [0, 2], sizes = [16, 16], strides = [1, 1]} : vector<16x22xf32> to vector<16x16xf32>
    %c16 = arith.constant 16 : index
    %100 = memref.load %arg2[%c16] : memref<49xf32, #tpu.memory_space<smem>>
    %101 = vector.broadcast %100 : f32 to vector<16x16xf32>
    %102 = arith.mulf %101, %99 : vector<16x16xf32>
    %103 = arith.addf %98, %102 : vector<16x16xf32>
    %104 = vector.extract_strided_slice %88 {offsets = [0, 3], sizes = [16, 16], strides = [1, 1]} : vector<16x22xf32> to vector<16x16xf32>
    %c17 = arith.constant 17 : index
    %105 = memref.load %arg2[%c17] : memref<49xf32, #tpu.memory_space<smem>>
    %106 = vector.broadcast %105 : f32 to vector<16x16xf32>
    %107 = arith.mulf %106, %104 : vector<16x16xf32>
    %108 = arith.addf %103, %107 : vector<16x16xf32>
    %109 = vector.extract_strided_slice %88 {offsets = [0, 4], sizes = [16, 16], strides = [1, 1]} : vector<16x22xf32> to vector<16x16xf32>
    %c18 = arith.constant 18 : index
    %110 = memref.load %arg2[%c18] : memref<49xf32, #tpu.memory_space<smem>>
    %111 = vector.broadcast %110 : f32 to vector<16x16xf32>
    %112 = arith.mulf %111, %109 : vector<16x16xf32>
    %113 = arith.addf %108, %112 : vector<16x16xf32>
    %114 = vector.extract_strided_slice %88 {offsets = [0, 5], sizes = [16, 16], strides = [1, 1]} : vector<16x22xf32> to vector<16x16xf32>
    %c19 = arith.constant 19 : index
    %115 = memref.load %arg2[%c19] : memref<49xf32, #tpu.memory_space<smem>>
    %116 = vector.broadcast %115 : f32 to vector<16x16xf32>
    %117 = arith.mulf %116, %114 : vector<16x16xf32>
    %118 = arith.addf %113, %117 : vector<16x16xf32>
    %119 = vector.extract_strided_slice %88 {offsets = [0, 6], sizes = [16, 16], strides = [1, 1]} : vector<16x22xf32> to vector<16x16xf32>
    %c20 = arith.constant 20 : index
    %120 = memref.load %arg2[%c20] : memref<49xf32, #tpu.memory_space<smem>>
    %121 = vector.broadcast %120 : f32 to vector<16x16xf32>
    %122 = arith.mulf %121, %119 : vector<16x16xf32>
    %123 = arith.addf %118, %122 : vector<16x16xf32>
    %124 = vector.extract_strided_slice %14 {offsets = [3, 0], sizes = [16, 22], strides = [1, 1]} : vector<22x22xf32> to vector<16x22xf32>
    %125 = vector.extract_strided_slice %124 {offsets = [0, 0], sizes = [16, 16], strides = [1, 1]} : vector<16x22xf32> to vector<16x16xf32>
    %c21 = arith.constant 21 : index
    %126 = memref.load %arg2[%c21] : memref<49xf32, #tpu.memory_space<smem>>
    %127 = vector.broadcast %126 : f32 to vector<16x16xf32>
    %128 = arith.mulf %127, %125 : vector<16x16xf32>
    %129 = arith.addf %123, %128 : vector<16x16xf32>
    %130 = vector.extract_strided_slice %124 {offsets = [0, 1], sizes = [16, 16], strides = [1, 1]} : vector<16x22xf32> to vector<16x16xf32>
    %c22 = arith.constant 22 : index
    %131 = memref.load %arg2[%c22] : memref<49xf32, #tpu.memory_space<smem>>
    %132 = vector.broadcast %131 : f32 to vector<16x16xf32>
    %133 = arith.mulf %132, %130 : vector<16x16xf32>
    %134 = arith.addf %129, %133 : vector<16x16xf32>
    %135 = vector.extract_strided_slice %124 {offsets = [0, 2], sizes = [16, 16], strides = [1, 1]} : vector<16x22xf32> to vector<16x16xf32>
    %c23 = arith.constant 23 : index
    %136 = memref.load %arg2[%c23] : memref<49xf32, #tpu.memory_space<smem>>
    %137 = vector.broadcast %136 : f32 to vector<16x16xf32>
    %138 = arith.mulf %137, %135 : vector<16x16xf32>
    %139 = arith.addf %134, %138 : vector<16x16xf32>
    %140 = vector.extract_strided_slice %124 {offsets = [0, 3], sizes = [16, 16], strides = [1, 1]} : vector<16x22xf32> to vector<16x16xf32>
    %c24 = arith.constant 24 : index
    %141 = memref.load %arg2[%c24] : memref<49xf32, #tpu.memory_space<smem>>
    %142 = vector.broadcast %141 : f32 to vector<16x16xf32>
    %143 = arith.mulf %142, %140 : vector<16x16xf32>
    %144 = arith.addf %139, %143 : vector<16x16xf32>
    %145 = vector.extract_strided_slice %124 {offsets = [0, 4], sizes = [16, 16], strides = [1, 1]} : vector<16x22xf32> to vector<16x16xf32>
    %c25 = arith.constant 25 : index
    %146 = memref.load %arg2[%c25] : memref<49xf32, #tpu.memory_space<smem>>
    %147 = vector.broadcast %146 : f32 to vector<16x16xf32>
    %148 = arith.mulf %147, %145 : vector<16x16xf32>
    %149 = arith.addf %144, %148 : vector<16x16xf32>
    %150 = vector.extract_strided_slice %124 {offsets = [0, 5], sizes = [16, 16], strides = [1, 1]} : vector<16x22xf32> to vector<16x16xf32>
    %c26 = arith.constant 26 : index
    %151 = memref.load %arg2[%c26] : memref<49xf32, #tpu.memory_space<smem>>
    %152 = vector.broadcast %151 : f32 to vector<16x16xf32>
    %153 = arith.mulf %152, %150 : vector<16x16xf32>
    %154 = arith.addf %149, %153 : vector<16x16xf32>
    %155 = vector.extract_strided_slice %124 {offsets = [0, 6], sizes = [16, 16], strides = [1, 1]} : vector<16x22xf32> to vector<16x16xf32>
    %c27 = arith.constant 27 : index
    %156 = memref.load %arg2[%c27] : memref<49xf32, #tpu.memory_space<smem>>
    %157 = vector.broadcast %156 : f32 to vector<16x16xf32>
    %158 = arith.mulf %157, %155 : vector<16x16xf32>
    %159 = arith.addf %154, %158 : vector<16x16xf32>
    %160 = vector.extract_strided_slice %14 {offsets = [4, 0], sizes = [16, 22], strides = [1, 1]} : vector<22x22xf32> to vector<16x22xf32>
    %161 = vector.extract_strided_slice %160 {offsets = [0, 0], sizes = [16, 16], strides = [1, 1]} : vector<16x22xf32> to vector<16x16xf32>
    %c28 = arith.constant 28 : index
    %162 = memref.load %arg2[%c28] : memref<49xf32, #tpu.memory_space<smem>>
    %163 = vector.broadcast %162 : f32 to vector<16x16xf32>
    %164 = arith.mulf %163, %161 : vector<16x16xf32>
    %165 = arith.addf %159, %164 : vector<16x16xf32>
    %166 = vector.extract_strided_slice %160 {offsets = [0, 1], sizes = [16, 16], strides = [1, 1]} : vector<16x22xf32> to vector<16x16xf32>
    %c29 = arith.constant 29 : index
    %167 = memref.load %arg2[%c29] : memref<49xf32, #tpu.memory_space<smem>>
    %168 = vector.broadcast %167 : f32 to vector<16x16xf32>
    %169 = arith.mulf %168, %166 : vector<16x16xf32>
    %170 = arith.addf %165, %169 : vector<16x16xf32>
    %171 = vector.extract_strided_slice %160 {offsets = [0, 2], sizes = [16, 16], strides = [1, 1]} : vector<16x22xf32> to vector<16x16xf32>
    %c30 = arith.constant 30 : index
    %172 = memref.load %arg2[%c30] : memref<49xf32, #tpu.memory_space<smem>>
    %173 = vector.broadcast %172 : f32 to vector<16x16xf32>
    %174 = arith.mulf %173, %171 : vector<16x16xf32>
    %175 = arith.addf %170, %174 : vector<16x16xf32>
    %176 = vector.extract_strided_slice %160 {offsets = [0, 3], sizes = [16, 16], strides = [1, 1]} : vector<16x22xf32> to vector<16x16xf32>
    %c31 = arith.constant 31 : index
    %177 = memref.load %arg2[%c31] : memref<49xf32, #tpu.memory_space<smem>>
    %178 = vector.broadcast %177 : f32 to vector<16x16xf32>
    %179 = arith.mulf %178, %176 : vector<16x16xf32>
    %180 = arith.addf %175, %179 : vector<16x16xf32>
    %181 = vector.extract_strided_slice %160 {offsets = [0, 4], sizes = [16, 16], strides = [1, 1]} : vector<16x22xf32> to vector<16x16xf32>
    %c32 = arith.constant 32 : index
    %182 = memref.load %arg2[%c32] : memref<49xf32, #tpu.memory_space<smem>>
    %183 = vector.broadcast %182 : f32 to vector<16x16xf32>
    %184 = arith.mulf %183, %181 : vector<16x16xf32>
    %185 = arith.addf %180, %184 : vector<16x16xf32>
    %186 = vector.extract_strided_slice %160 {offsets = [0, 5], sizes = [16, 16], strides = [1, 1]} : vector<16x22xf32> to vector<16x16xf32>
    %c33 = arith.constant 33 : index
    %187 = memref.load %arg2[%c33] : memref<49xf32, #tpu.memory_space<smem>>
    %188 = vector.broadcast %187 : f32 to vector<16x16xf32>
    %189 = arith.mulf %188, %186 : vector<16x16xf32>
    %190 = arith.addf %185, %189 : vector<16x16xf32>
    %191 = vector.extract_strided_slice %160 {offsets = [0, 6], sizes = [16, 16], strides = [1, 1]} : vector<16x22xf32> to vector<16x16xf32>
    %c34 = arith.constant 34 : index
    %192 = memref.load %arg2[%c34] : memref<49xf32, #tpu.memory_space<smem>>
    %193 = vector.broadcast %192 : f32 to vector<16x16xf32>
    %194 = arith.mulf %193, %191 : vector<16x16xf32>
    %195 = arith.addf %190, %194 : vector<16x16xf32>
    %196 = vector.extract_strided_slice %14 {offsets = [5, 0], sizes = [16, 22], strides = [1, 1]} : vector<22x22xf32> to vector<16x22xf32>
    %197 = vector.extract_strided_slice %196 {offsets = [0, 0], sizes = [16, 16], strides = [1, 1]} : vector<16x22xf32> to vector<16x16xf32>
    %c35 = arith.constant 35 : index
    %198 = memref.load %arg2[%c35] : memref<49xf32, #tpu.memory_space<smem>>
    %199 = vector.broadcast %198 : f32 to vector<16x16xf32>
    %200 = arith.mulf %199, %197 : vector<16x16xf32>
    %201 = arith.addf %195, %200 : vector<16x16xf32>
    %202 = vector.extract_strided_slice %196 {offsets = [0, 1], sizes = [16, 16], strides = [1, 1]} : vector<16x22xf32> to vector<16x16xf32>
    %c36 = arith.constant 36 : index
    %203 = memref.load %arg2[%c36] : memref<49xf32, #tpu.memory_space<smem>>
    %204 = vector.broadcast %203 : f32 to vector<16x16xf32>
    %205 = arith.mulf %204, %202 : vector<16x16xf32>
    %206 = arith.addf %201, %205 : vector<16x16xf32>
    %207 = vector.extract_strided_slice %196 {offsets = [0, 2], sizes = [16, 16], strides = [1, 1]} : vector<16x22xf32> to vector<16x16xf32>
    %c37 = arith.constant 37 : index
    %208 = memref.load %arg2[%c37] : memref<49xf32, #tpu.memory_space<smem>>
    %209 = vector.broadcast %208 : f32 to vector<16x16xf32>
    %210 = arith.mulf %209, %207 : vector<16x16xf32>
    %211 = arith.addf %206, %210 : vector<16x16xf32>
    %212 = vector.extract_strided_slice %196 {offsets = [0, 3], sizes = [16, 16], strides = [1, 1]} : vector<16x22xf32> to vector<16x16xf32>
    %c38 = arith.constant 38 : index
    %213 = memref.load %arg2[%c38] : memref<49xf32, #tpu.memory_space<smem>>
    %214 = vector.broadcast %213 : f32 to vector<16x16xf32>
    %215 = arith.mulf %214, %212 : vector<16x16xf32>
    %216 = arith.addf %211, %215 : vector<16x16xf32>
    %217 = vector.extract_strided_slice %196 {offsets = [0, 4], sizes = [16, 16], strides = [1, 1]} : vector<16x22xf32> to vector<16x16xf32>
    %c39 = arith.constant 39 : index
    %218 = memref.load %arg2[%c39] : memref<49xf32, #tpu.memory_space<smem>>
    %219 = vector.broadcast %218 : f32 to vector<16x16xf32>
    %220 = arith.mulf %219, %217 : vector<16x16xf32>
    %221 = arith.addf %216, %220 : vector<16x16xf32>
    %222 = vector.extract_strided_slice %196 {offsets = [0, 5], sizes = [16, 16], strides = [1, 1]} : vector<16x22xf32> to vector<16x16xf32>
    %c40 = arith.constant 40 : index
    %223 = memref.load %arg2[%c40] : memref<49xf32, #tpu.memory_space<smem>>
    %224 = vector.broadcast %223 : f32 to vector<16x16xf32>
    %225 = arith.mulf %224, %222 : vector<16x16xf32>
    %226 = arith.addf %221, %225 : vector<16x16xf32>
    %227 = vector.extract_strided_slice %196 {offsets = [0, 6], sizes = [16, 16], strides = [1, 1]} : vector<16x22xf32> to vector<16x16xf32>
    %c41 = arith.constant 41 : index
    %228 = memref.load %arg2[%c41] : memref<49xf32, #tpu.memory_space<smem>>
    %229 = vector.broadcast %228 : f32 to vector<16x16xf32>
    %230 = arith.mulf %229, %227 : vector<16x16xf32>
    %231 = arith.addf %226, %230 : vector<16x16xf32>
    %232 = vector.extract_strided_slice %14 {offsets = [6, 0], sizes = [16, 22], strides = [1, 1]} : vector<22x22xf32> to vector<16x22xf32>
    %233 = vector.extract_strided_slice %232 {offsets = [0, 0], sizes = [16, 16], strides = [1, 1]} : vector<16x22xf32> to vector<16x16xf32>
    %c42 = arith.constant 42 : index
    %234 = memref.load %arg2[%c42] : memref<49xf32, #tpu.memory_space<smem>>
    %235 = vector.broadcast %234 : f32 to vector<16x16xf32>
    %236 = arith.mulf %235, %233 : vector<16x16xf32>
    %237 = arith.addf %231, %236 : vector<16x16xf32>
    %238 = vector.extract_strided_slice %232 {offsets = [0, 1], sizes = [16, 16], strides = [1, 1]} : vector<16x22xf32> to vector<16x16xf32>
    %c43 = arith.constant 43 : index
    %239 = memref.load %arg2[%c43] : memref<49xf32, #tpu.memory_space<smem>>
    %240 = vector.broadcast %239 : f32 to vector<16x16xf32>
    %241 = arith.mulf %240, %238 : vector<16x16xf32>
    %242 = arith.addf %237, %241 : vector<16x16xf32>
    %243 = vector.extract_strided_slice %232 {offsets = [0, 2], sizes = [16, 16], strides = [1, 1]} : vector<16x22xf32> to vector<16x16xf32>
    %c44 = arith.constant 44 : index
    %244 = memref.load %arg2[%c44] : memref<49xf32, #tpu.memory_space<smem>>
    %245 = vector.broadcast %244 : f32 to vector<16x16xf32>
    %246 = arith.mulf %245, %243 : vector<16x16xf32>
    %247 = arith.addf %242, %246 : vector<16x16xf32>
    %248 = vector.extract_strided_slice %232 {offsets = [0, 3], sizes = [16, 16], strides = [1, 1]} : vector<16x22xf32> to vector<16x16xf32>
    %c45 = arith.constant 45 : index
    %249 = memref.load %arg2[%c45] : memref<49xf32, #tpu.memory_space<smem>>
    %250 = vector.broadcast %249 : f32 to vector<16x16xf32>
    %251 = arith.mulf %250, %248 : vector<16x16xf32>
    %252 = arith.addf %247, %251 : vector<16x16xf32>
    %253 = vector.extract_strided_slice %232 {offsets = [0, 4], sizes = [16, 16], strides = [1, 1]} : vector<16x22xf32> to vector<16x16xf32>
    %c46 = arith.constant 46 : index
    %254 = memref.load %arg2[%c46] : memref<49xf32, #tpu.memory_space<smem>>
    %255 = vector.broadcast %254 : f32 to vector<16x16xf32>
    %256 = arith.mulf %255, %253 : vector<16x16xf32>
    %257 = arith.addf %252, %256 : vector<16x16xf32>
    %258 = vector.extract_strided_slice %232 {offsets = [0, 5], sizes = [16, 16], strides = [1, 1]} : vector<16x22xf32> to vector<16x16xf32>
    %c47 = arith.constant 47 : index
    %259 = memref.load %arg2[%c47] : memref<49xf32, #tpu.memory_space<smem>>
    %260 = vector.broadcast %259 : f32 to vector<16x16xf32>
    %261 = arith.mulf %260, %258 : vector<16x16xf32>
    %262 = arith.addf %257, %261 : vector<16x16xf32>
    %263 = vector.extract_strided_slice %232 {offsets = [0, 6], sizes = [16, 16], strides = [1, 1]} : vector<16x22xf32> to vector<16x16xf32>
    %c48 = arith.constant 48 : index
    %264 = memref.load %arg2[%c48] : memref<49xf32, #tpu.memory_space<smem>>
    %265 = vector.broadcast %264 : f32 to vector<16x16xf32>
    %266 = arith.mulf %265, %263 : vector<16x16xf32>
    %267 = arith.addf %262, %266 : vector<16x16xf32>
    %cst_18 = arith.constant 0.000000e+00 : f32
    %268 = vector.broadcast %cst_18 : f32 to vector<16x16xf32>
    %269 = arith.subf %268, %267 : vector<16x16xf32>
    %270 = math.exp %269 : vector<16x16xf32>
    %cst_19 = arith.constant 1.000000e+00 : f32
    %271 = vector.broadcast %cst_19 : f32 to vector<16x16xf32>
    %272 = arith.addf %271, %270 : vector<16x16xf32>
    %cst_20 = arith.constant 1.000000e+00 : f32
    %273 = vector.broadcast %cst_20 : f32 to vector<16x16xf32>
    %274 = arith.divf %273, %272 : vector<16x16xf32>
    %c0_21 = arith.constant 0 : index
    %c0_22 = arith.constant 0 : index
    %c0_23 = arith.constant 0 : index
    %c0_24 = arith.constant 0 : index
    %275 = vector.load %arg3[%c0_21, %c0_22, %c0_23, %c0_24] : memref<1x1x16x16xf32, #tpu.memory_space<vmem>>, vector<1x1x16x16xf32>
    %276 = vector.shape_cast %275 : vector<1x1x16x16xf32> to vector<16x16xf32>
    %277 = vector.shape_cast %274 : vector<16x16xf32> to vector<1x1x16x16xf32>
    tpu.vector_store %arg3[%c0_21, %c0_22, %c0_23, %c0_24], %277 {strides = array<i32>} : memref<1x1x16x16xf32, #tpu.memory_space<vmem>>, vector<1x1x16x16xf32>,
    return
  }
  func.func @transform_0(%arg0: i32) -> (i32, i32, i32, i32) {
    %c0_i32 = arith.constant 0 : i32
    %c0_i32_0 = arith.constant 0 : i32
    %c0_i32_1 = arith.constant 0 : i32
    %c0_i32_2 = arith.constant 0 : i32
    return %arg0, %c0_i32, %c0_i32_0, %c0_i32_1 : i32, i32, i32, i32
  }
  func.func @transform_1(%arg0: i32) -> i32 {
    %c0_i32 = arith.constant 0 : i32
    %c0_i32_0 = arith.constant 0 : i32
    return %c0_i32 : i32
  }
  func.func @transform_2(%arg0: i32) -> (i32, i32, i32, i32) {
    %c0_i32 = arith.constant 0 : i32
    %c0_i32_0 = arith.constant 0 : i32
    %c0_i32_1 = arith.constant 0 : i32
    %c0_i32_2 = arith.constant 0 : i32
    return %arg0, %c0_i32, %c0_i32_0, %c0_i32_1 : i32, i32, i32, i32
  }
}

</mosaic_0001>

<llo_original>
// kernel: tpu_custom_call.1
$region0: #{tpu_custom_call.1}
  #allocation0 [shape = 'u32[]', space=smem, size = 0x4, offset = 0x4, fixed_abs, tag = 'smem constant byte address 0x4 - core index']
  #allocation1 [shape = 'u32[144,128]{1,0:T(1,128)}', space=vmem, size = 0x12000, scoped, tag = 'internal scratch']
  %s0 = inlined_call_operand.hbm [shape: f32[2,4,16,16], index: 0, kind: input, shape index: {}]
  %s1 = inlined_call_operand.vmem [shape: f32[49], index: 1, kind: input, shape index: {}]
  %s2 = inlined_call_operand.hbm [shape: f32[2,1,16,16], index: 2, kind: output, shape index: {}]
  %s3 = sld [smem:[#allocation0]]
  $region49: #{tpu_custom_call.1} parent=0
    _
  %s5 = ssub.s32 1, %s3
  %s6 = scalar_select 0, %s5, %s3
  $region1: #{tpu_custom_call.1} parent=0
    #allocation2 [shape = 'u8[65536]{0}', space=vmem, size = 0x10000, scoped, tag = 'input window, operand 0']
    #allocation3 [shape = 's32[2]{0}', space=sflag, size = 0x8, scoped, tag = 'scoped memory for tpu_custom_call.1']
    #allocation4 [shape = 's32[2]{0}', space=sflag, size = 0x8, scoped, tag = 'scoped memory for tpu_custom_call.1']
    #allocation5 [shape = 's32[2]{0}', space=sflag, size = 0x8, scoped, tag = 'scoped memory for tpu_custom_call.1']
    #allocation6 [shape = 'u8[512]{0}', space=smem, size = 0x200, scoped, tag = 'input window, operand 1, single buffered']
    #allocation7 [shape = 'u8[16384]{0}', space=vmem, size = 0x4000, scoped, tag = 'output window, operand 0']
    %7 = vsyncpa [#allocation3], 0
    %s8 = scalar_lea.sflag [#allocation3], 1
    %9 = vsyncpa %s8, 0
    %10 = vsyncpa [#allocation5], 0
    %11 = vsyncpa [#allocation4], 0
    %s12 = scalar_lea.sflag [#allocation4], 1
    %13 = vsyncpa %s12, 0
    loop: start=0, step=1, limit=4
    $region2: #{tpu_custom_call.1} parent=1 // loop_pre_header
      _
    $region3: #{tpu_custom_call.1} parent=1 // loop_header
      %s15 = sphi 0, %s19
      %p16 = scmp.ge.s32.totalorder %s15, 4
      %s25 = sphi 0, %s27
      %s28 = sphi 0, %s25
      %s29 = sphi 0, %s28
      %s45 = sphi 0, %s29
      %s49 = sphi 0, %s49
      %s51 = sphi 0, %s49
      %s52 = sphi 0, %s51
      %s66 = sphi 0, %s52
      %s72 = sphi 0, %s74
      %s75 = sphi 0, %s72
      %s76 = sphi 0, %s75
      %s92 = sphi 0, %s76
    $region4: #{tpu_custom_call.1} parent=1 // loop_header_branch
      %18 = sbr.rel (%p16) target = $region8
    $region5: #{tpu_custom_call.1} parent=1 // loop_body
      %s20 = ssub.s32 %s15, 1
      %s21 = ssub.s32 %s15, 2
      %s22 = sadd.s32 %s15, 1
      %s23 = ssub.s32 %s15, %s22
      %p24 = scmp.eq.s32.totalorder %s23, 0
      %s26 = sadd.s32 %s25, 1
      %s27 = scalar_select %p24, %s25, %s26
      %p30 = pneg %p24
      %p31 = scmp.eq.s32.totalorder %s15, 1
      %p32 = por %p30, %p31
      %p33 = scmp.ne.s32.totalorder %s25, %s28
      %p34 = scmp.eq.s32.totalorder %s15, 0
      %p35 = por %p33, %p34
      %p36 = scmp.ne.s32.totalorder %s25, %s28
      %p37 = scmp.eq.s32.totalorder %s20, 1
      %p38 = por %p36, %p37
      %p39 = scmp.ne.s32.totalorder %s28, %s29
      %p40 = scmp.eq.s32.totalorder %s20, 0
      %p41 = por %p39, %p40
      %p42 = scmp.ne.s32.totalorder %s28, %s29
      %p43 = scmp.eq.s32.totalorder %s21, 1
      %p44 = por %p42, %p43
      %p46 = scmp.ne.s32.totalorder %s29, %s45
      %p47 = scmp.eq.s32.totalorder %s21, 0
      %p48 = por %p46, %p47
      %s50 = sadd.s32 %s49, 1
      %p53 = scmp.eq.s32.totalorder %s15, 1
      %p54 = scmp.ne.s32.totalorder %s49, %s51
      %p55 = scmp.eq.s32.totalorder %s15, 0
      %p56 = por %p54, %p55
      %p57 = scmp.ne.s32.totalorder %s49, %s51
      %p58 = scmp.eq.s32.totalorder %s20, 1
      %p59 = por %p57, %p58
      %p60 = scmp.ne.s32.totalorder %s51, %s52
      %p61 = scmp.eq.s32.totalorder %s20, 0
      %p62 = por %p60, %p61
      %p63 = scmp.ne.s32.totalorder %s51, %s52
      %p64 = scmp.eq.s32.totalorder %s21, 1
      %p65 = por %p63, %p64
      %p67 = scmp.ne.s32.totalorder %s52, %s66
      %p68 = scmp.eq.s32.totalorder %s21, 0
      %p69 = por %p67, %p68
      %s70 = ssub.s32 %s15, %s22
      %p71 = scmp.eq.s32.totalorder %s70, 0
      %s73 = sadd.s32 %s72, 1
      %s74 = scalar_select %p71, %s72, %s73
      %p77 = pneg %p71
      %p78 = scmp.eq.s32.totalorder %s15, 1
      %p79 = por %p77, %p78
      %p80 = scmp.ne.s32.totalorder %s72, %s75
      %p81 = scmp.eq.s32.totalorder %s15, 0
      %p82 = por %p80, %p81
      %p83 = scmp.ne.s32.totalorder %s72, %s75
      %p84 = scmp.eq.s32.totalorder %s20, 1
      %p85 = por %p83, %p84
      %p86 = scmp.ne.s32.totalorder %s75, %s76
      %p87 = scmp.eq.s32.totalorder %s20, 0
      %p88 = por %p86, %p87
      %p89 = scmp.ne.s32.totalorder %s75, %s76
      %p90 = scmp.eq.s32.totalorder %s21, 1
      %p91 = por %p89, %p90
      %p93 = scmp.ne.s32.totalorder %s76, %s92
      %p94 = scmp.eq.s32.totalorder %s21, 0
      %p95 = por %p93, %p94
      %p96 = scmp.le.s32.totalorder 1, %s15
      %p97 = scmp.lt.s32.totalorder %s15, 3
      %p98 = pnand %p96, %p97
      %p99 = pneg %p98
      // Predicated region
      $region9: #{tpu_custom_call.1} parent=5 // pred_check
        _
      $region10: #{tpu_custom_call.1} parent=5 // pred_check_branch
        %101 = sbr.rel (%p98) target = $region12
      $region11: #{tpu_custom_call.1} parent=5 // pred_region
        %s102 = ssub.s32 %s15, 1
        // Predicated region
        $region13: #{tpu_custom_call.1} parent=11 // pred_check
          %p103 = pneg %p62
        $region14: #{tpu_custom_call.1} parent=11 // pred_check_branch
          %105 = sbr.rel (%p103) target = $region16
        $region15: #{tpu_custom_call.1} parent=11 // pred_region
          %s107 = ssub.s32 16, 16
          %108 = vsyncadd [#allocation5], %s107
          %s110 = sshll.u32 %s1, 4
          %s111 = int_to_ptr.vmem [resolvable:$true] %s110
          %113 = dma.vmem_to_smem %s111, 16, [#allocation6], [#allocation5]
        $region16: #{tpu_custom_call.1} parent=11 // pred_fallthru
          _
      $region12: #{tpu_custom_call.1} parent=5 // pred_fallthru
        _
      %p114 = scmp.lt.s32.totalorder %s15, 2
      // Predicated region
      $region17: #{tpu_custom_call.1} parent=5 // pred_check
        %p115 = pneg %p114
      $region18: #{tpu_custom_call.1} parent=5 // pred_check_branch
        %117 = sbr.rel (%p115) target = $region20
      $region19: #{tpu_custom_call.1} parent=5 // pred_region
        // Predicated region
        $region21: #{tpu_custom_call.1} parent=19 // pred_check
          %p118 = pneg %p35
        $region22: #{tpu_custom_call.1} parent=19 // pred_check_branch
          %120 = sbr.rel (%p118) target = $region24
        $region23: #{tpu_custom_call.1} parent=19 // pred_region
          %s121 = sand.u32 %s25, 1
          %s122 = scalar_lea.sflag [#allocation3], %s121
          %s123 = sand.u32 %s25, 1
          %s124 = smul.addr %s123, 64
          %s125 = scalar_lea.vmem [#allocation2], %s124
          %s127 = ssub.s32 1024, 1024
          %128 = vsyncadd %s122, %s127
          %s129 = smul.addr %s15, 8
          %s130 = smul.addr %s129, 128
          %s131 = scalar_lea.hbm %s0, %s130
          %s132 = sshll.u32 %s125, 4
          %s133 = int_to_ptr.vmem [resolvable:$true] %s132
          %138 = dma.hbm_to_vmem [thread:$0]  %s131, 1024, %s133, %s122, 128, 128, 8
        $region24: #{tpu_custom_call.1} parent=19 // pred_fallthru
          _
      $region20: #{tpu_custom_call.1} parent=5 // pred_fallthru
        _
      %p139 = scmp.le.s32.totalorder 1, %s15
      %p140 = scmp.lt.s32.totalorder %s15, 3
      %p141 = pnand %p139, %p140
      %p142 = pneg %p141
      // Predicated region
      $region25: #{tpu_custom_call.1} parent=5 // pred_check
        _
      $region26: #{tpu_custom_call.1} parent=5 // pred_check_branch
        %144 = sbr.rel (%p141) target = $region28
      $region27: #{tpu_custom_call.1} parent=5 // pred_region
        %s145 = ssub.s32 %s15, 1
        %s146 = sand.u32 %s28, 1
        %s147 = scalar_lea.sflag [#allocation3], %s146
        %s148 = sand.u32 %s28, 1
        %s149 = smul.addr %s148, 64
        %s150 = scalar_lea.vmem [#allocation2], %s149
        // Predicated region
        $region29: #{tpu_custom_call.1} parent=27 // pred_check
          %p151 = pneg %p41
        $region30: #{tpu_custom_call.1} parent=27 // pred_check_branch
          %153 = sbr.rel (%p151) target = $region32
        $region31: #{tpu_custom_call.1} parent=27 // pred_region
          %154 = dma.done %s147, 1024
        $region32: #{tpu_custom_call.1} parent=27 // pred_fallthru
          _
        // Predicated region
        $region33: #{tpu_custom_call.1} parent=27 // pred_check
          %p155 = pneg %p62
        $region34: #{tpu_custom_call.1} parent=27 // pred_check_branch
          %157 = sbr.rel (%p155) target = $region36
        $region35: #{tpu_custom_call.1} parent=27 // pred_region
          %158 = dma.done [#allocation5], 16
        $region36: #{tpu_custom_call.1} parent=27 // pred_fallthru
          _
        %159 = sfence
        %s160 = sand.u32 %s28, 1
        %s161 = scalar_lea.sflag [#allocation3], %s160
        %s162 = sand.u32 %s28, 1
        %s163 = smul.addr %s162, 64
        %s164 = scalar_lea.vmem [#allocation2], %s163
        %p165 = pneg %p41
        %p166 = pneg %p38
        %p167 = pneg %p62
        %p168 = pneg %p59
        %p169 = pneg %p88
        %p170 = pneg %p85
        %s171 = sand.u32 %s75, 1
        %s172 = scalar_lea.sflag [#allocation4], %s171
        %s173 = sand.u32 %s75, 1
        %s174 = smul.addr %s173, 16
        %s175 = scalar_lea.vmem [#allocation7], %s174
        %v176 = vld [vmem:[%s150] sm:$0xff]
        %v177 = vld [vmem:[%s150 + $0x8] sm:$0xff]
        %s178 = scalar_lea.vmem %s150, 16 [#allocation2]
        %v179 = vld [vmem:[%s178] sm:$0xff]
        %v180 = vld [vmem:[%s178 + $0x8] sm:$0xff]
        %v181 = vmax.f32 %v176, %v179
        %v182 = vmax.f32 %v177, %v180
        %s183 = scalar_lea.vmem %s150, 32 [#allocation2]
        %v184 = vld [vmem:[%s183] sm:$0xff]
        %v185 = vld [vmem:[%s183 + $0x8] sm:$0xff]
        %v186 = vmax.f32 %v181, %v184
        %v187 = vmax.f32 %v182, %v185
        %s188 = scalar_lea.vmem %s150, 48 [#allocation2]
        %v189 = vld [vmem:[%s188] sm:$0xff]
        %v190 = vld [vmem:[%s188 + $0x8] sm:$0xff]
        %v191 = vmax.f32 %v186, %v189
        %v192 = vmax.f32 %v187, %v190
        %vm195 = vcmask 1042432
        %v196 = vrot.slane %v191, 5
        %v197 = vrot.slane %v192, 5
        %v198 = vsel %vm195, %v196, %v197
        %v201 = vsel %vm195, 0.0, %v196
        %v202 = vsel %vm195, %v197, 0.0
        %205 = vrot.lane.b32.xlu0 %v201, 3
        %v206 = vpop.permute.xlu0 %205
        %207 = vrot.lane.b32.xlu0 %v198, 3
        %v208 = vpop.permute.xlu0 %207
        %209 = vrot.lane.b32.xlu0 %v202, 3
        %v210 = vpop.permute.xlu0 %209
        %vm214 = vcmask 23552
        %v215 = vsel %vm214, 0.0, %v206
        %v216 = vsel %vm214, 0.0, %v208
        %v217 = vsel %vm214, 0.0, %v210
        %vm218 = vcmask 154624
        %v219 = vsel %vm218, %v215, 0.0
        %v220 = vsel %vm218, %v216, 0.0
        %v221 = vsel %vm218, %v217, 0.0
        %s222 = sld [smem:[#allocation6]]
        %v223 = vstv %s222
        %v224 = vmul.f32 %v223, %v219
        %v225 = vmul.f32 %v223, %v220
        %v226 = vadd.f32 %v224, 0.0
        %v227 = vadd.f32 %v225, 0.0
        %s228 = sld [smem:[#allocation6 + $0x1]]
        %v229 = vstv %s228
        %v230 = vmul.f32 %v229, %v219
        %v231 = vmul.f32 %v229, %v220
        %234 = vrot.lane.b32.xlu0 %v230, 127
        %v235 = vpop.permute.xlu0 %234
        %236 = vrot.lane.b32.xlu0 %v231, 127
        %v237 = vpop.permute.xlu0 %236
        %v240 = vadd.f32 %v226, %v235
        %v241 = vadd.f32 %v227, %v237
        %s242 = sld [smem:[#allocation6 + $0x2]]
        %v243 = vstv %s242
        %v244 = vmul.f32 %v243, %v219
        %v245 = vmul.f32 %v243, %v220
        %248 = vrot.lane.b32.xlu0 %v244, 126
        %v249 = vpop.permute.xlu0 %248
        %250 = vrot.lane.b32.xlu0 %v245, 126
        %v251 = vpop.permute.xlu0 %250
        %v254 = vadd.f32 %v240, %v249
        %v255 = vadd.f32 %v241, %v251
        %s256 = sld [smem:[#allocation6 + $0x3]]
        %v257 = vstv %s256
        %v258 = vmul.f32 %v257, %v219
        %v259 = vmul.f32 %v257, %v220
        %262 = vrot.lane.b32.xlu0 %v258, 125
        %v263 = vpop.permute.xlu0 %262
        %264 = vrot.lane.b32.xlu0 %v259, 125
        %v265 = vpop.permute.xlu0 %264
        %v268 = vadd.f32 %v254, %v263
        %v269 = vadd.f32 %v255, %v265
        %s270 = sld [smem:[#allocation6 + $0x4]]
        %v271 = vstv %s270
        %v272 = vmul.f32 %v271, %v219
        %v273 = vmul.f32 %v271, %v220
        %276 = vrot.lane.b32.xlu0 %v272, 124
        %v277 = vpop.permute.xlu0 %276
        %278 = vrot.lane.b32.xlu0 %v273, 124
        %v279 = vpop.permute.xlu0 %278
        %v282 = vadd.f32 %v268, %v277
        %v283 = vadd.f32 %v269, %v279
        %s284 = sld [smem:[#allocation6 + $0x5]]
        %v285 = vstv %s284
        %v286 = vmul.f32 %v285, %v219
        %v287 = vmul.f32 %v285, %v220
        %290 = vrot.lane.b32.xlu0 %v286, 123
        %v291 = vpop.permute.xlu0 %290
        %292 = vrot.lane.b32.xlu0 %v287, 123
        %v293 = vpop.permute.xlu0 %292
        %v296 = vadd.f32 %v282, %v291
        %v297 = vadd.f32 %v283, %v293
        %s298 = sld [smem:[#allocation6 + $0x6]]
        %v299 = vstv %s298
        %v300 = vmul.f32 %v299, %v219
        %v301 = vmul.f32 %v299, %v220
        %304 = vrot.lane.b32.xlu0 %v300, 122
        %v305 = vpop.permute.xlu0 %304
        %306 = vrot.lane.b32.xlu0 %v301, 122
        %v307 = vpop.permute.xlu0 %306
        %v310 = vadd.f32 %v296, %v305
        %v311 = vadd.f32 %v297, %v307
        %s312 = sld [smem:[#allocation6 + $0x7]]
        %v313 = vstv %s312
        %v314 = vmul.f32 %v313, %v219
        %v315 = vmul.f32 %v313, %v220
        %v316 = vmul.f32 %v313, %v221
        %vm320 = vcmask 1046528
        %v321 = vrot.slane %v314, 1
        %v322 = vrot.slane %v315, 1
        %v323 = vsel %vm320, %v321, %v322
        %v324 = vrot.slane %v316, 1
        %v325 = vsel %vm320, %v322, %v324
        %v328 = vadd.f32 %v310, %v323
        %v329 = vadd.f32 %v311, %v325
        %s330 = sld [smem:[#allocation6 + $0x8]]
        %v331 = vstv %s330
        %v332 = vmul.f32 %v331, %v219
        %v333 = vmul.f32 %v331, %v220
        %v334 = vmul.f32 %v331, %v221
        %v338 = vrot.slane %v332, 1
        %v339 = vrot.slane %v333, 1
        %v340 = vsel %vm320, %v338, %v339
        %v341 = vrot.slane %v334, 1
        %v342 = vsel %vm320, %v339, %v341
        %343 = vrot.lane.b32.xlu0 %v340, 127
        %v344 = vpop.permute.xlu0 %343
        %345 = vrot.lane.b32.xlu0 %v342, 127
        %v346 = vpop.permute.xlu0 %345
        %v349 = vadd.f32 %v328, %v344
        %v350 = vadd.f32 %v329, %v346
        %s351 = sld [smem:[#allocation6 + $0x9]]
        %v352 = vstv %s351
        %v353 = vmul.f32 %v352, %v219
        %v354 = vmul.f32 %v352, %v220
        %v355 = vmul.f32 %v352, %v221
        %v359 = vrot.slane %v353, 1
        %v360 = vrot.slane %v354, 1
        %v361 = vsel %vm320, %v359, %v360
        %v362 = vrot.slane %v355, 1
        %v363 = vsel %vm320, %v360, %v362
        %364 = vrot.lane.b32.xlu0 %v361, 126
        %v365 = vpop.permute.xlu0 %364
        %366 = vrot.lane.b32.xlu0 %v363, 126
        %v367 = vpop.permute.xlu0 %366
        %v370 = vadd.f32 %v349, %v365
        %v371 = vadd.f32 %v350, %v367
        %s372 = sld [smem:[#allocation6 + $0xa]]
        %v373 = vstv %s372
        %v374 = vmul.f32 %v373, %v219
        %v375 = vmul.f32 %v373, %v220
        %v376 = vmul.f32 %v373, %v221
        %v380 = vrot.slane %v374, 1
        %v381 = vrot.slane %v375, 1
        %v382 = vsel %vm320, %v380, %v381
        %v383 = vrot.slane %v376, 1
        %v384 = vsel %vm320, %v381, %v383
        %385 = vrot.lane.b32.xlu0 %v382, 125
        %v386 = vpop.permute.xlu0 %385
        %387 = vrot.lane.b32.xlu0 %v384, 125
        %v388 = vpop.permute.xlu0 %387
        %v391 = vadd.f32 %v370, %v386
        %v392 = vadd.f32 %v371, %v388
        %s393 = sld [smem:[#allocation6 + $0xb]]
        %v394 = vstv %s393
        %v395 = vmul.f32 %v394, %v219
        %v396 = vmul.f32 %v394, %v220
        %v397 = vmul.f32 %v394, %v221
        %v401 = vrot.slane %v395, 1
        %v402 = vrot.slane %v396, 1
        %v403 = vsel %vm320, %v401, %v402
        %v404 = vrot.slane %v397, 1
        %v405 = vsel %vm320, %v402, %v404
        %406 = vrot.lane.b32.xlu0 %v403, 124
        %v407 = vpop.permute.xlu0 %406
        %408 = vrot.lane.b32.xlu0 %v405, 124
        %v409 = vpop.permute.xlu0 %408
        %v412 = vadd.f32 %v391, %v407
        %v413 = vadd.f32 %v392, %v409
        %s414 = sld [smem:[#allocation6 + $0xc]]
        %v415 = vstv %s414
        %v416 = vmul.f32 %v415, %v219
        %v417 = vmul.f32 %v415, %v220
        %v418 = vmul.f32 %v415, %v221
        %v422 = vrot.slane %v416, 1
        %v423 = vrot.slane %v417, 1
        %v424 = vsel %vm320, %v422, %v423
        %v425 = vrot.slane %v418, 1
        %v426 = vsel %vm320, %v423, %v425
        %427 = vrot.lane.b32.xlu0 %v424, 123
        %v428 = vpop.permute.xlu0 %427
        %429 = vrot.lane.b32.xlu0 %v426, 123
        %v430 = vpop.permute.xlu0 %429
        %v433 = vadd.f32 %v412, %v428
        %v434 = vadd.f32 %v413, %v430
        %s435 = sld [smem:[#allocation6 + $0xd]]
        %v436 = vstv %s435
        %v437 = vmul.f32 %v436, %v219
        %v438 = vmul.f32 %v436, %v220
        %v439 = vmul.f32 %v436, %v221
        %v443 = vrot.slane %v437, 1
        %v444 = vrot.slane %v438, 1
        %v445 = vsel %vm320, %v443, %v444
        %v446 = vrot.slane %v439, 1
        %v447 = vsel %vm320, %v444, %v446
        %448 = vrot.lane.b32.xlu0 %v445, 122
        %v449 = vpop.permute.xlu0 %448
        %450 = vrot.lane.b32.xlu0 %v447, 122
        %v451 = vpop.permute.xlu0 %450
        %v454 = vadd.f32 %v433, %v449
        %v455 = vadd.f32 %v434, %v451
        %s456 = sld [smem:[#allocation6 + $0xe]]
        %v457 = vstv %s456
        %v458 = vmul.f32 %v457, %v219
        %v459 = vmul.f32 %v457, %v220
        %v460 = vmul.f32 %v457, %v221
        %vm464 = vcmask 1045504
        %v465 = vrot.slane %v458, 2
        %v466 = vrot.slane %v459, 2
        %v467 = vsel %vm464, %v465, %v466
        %v468 = vrot.slane %v460, 2
        %v469 = vsel %vm464, %v466, %v468
        %v472 = vadd.f32 %v454, %v467
        %v473 = vadd.f32 %v455, %v469
        %s474 = sld [smem:[#allocation6 + $0xf]]
        %v475 = vstv %s474
        %v476 = vmul.f32 %v475, %v219
        %v477 = vmul.f32 %v475, %v220
        %v478 = vmul.f32 %v475, %v221
        %v482 = vrot.slane %v476, 2
        %v483 = vrot.slane %v477, 2
        %v484 = vsel %vm464, %v482, %v483
        %v485 = vrot.slane %v478, 2
        %v486 = vsel %vm464, %v483, %v485
        %487 = vrot.lane.b32.xlu0 %v484, 127
        %v488 = vpop.permute.xlu0 %487
        %489 = vrot.lane.b32.xlu0 %v486, 127
        %v490 = vpop.permute.xlu0 %489
        %v493 = vadd.f32 %v472, %v488
        %v494 = vadd.f32 %v473, %v490
        %s495 = sld [smem:[#allocation6 + $0x10]]
        %v496 = vstv %s495
        %v497 = vmul.f32 %v496, %v219
        %v498 = vmul.f32 %v496, %v220
        %v499 = vmul.f32 %v496, %v221
        %v503 = vrot.slane %v497, 2
        %v504 = vrot.slane %v498, 2
        %v505 = vsel %vm464, %v503, %v504
        %v506 = vrot.slane %v499, 2
        %v507 = vsel %vm464, %v504, %v506
        %508 = vrot.lane.b32.xlu0 %v505, 126
        %v509 = vpop.permute.xlu0 %508
        %510 = vrot.lane.b32.xlu0 %v507, 126
        %v511 = vpop.permute.xlu0 %510
        %v514 = vadd.f32 %v493, %v509
        %v515 = vadd.f32 %v494, %v511
        %s516 = sld [smem:[#allocation6 + $0x11]]
        %v517 = vstv %s516
        %v518 = vmul.f32 %v517, %v219
        %v519 = vmul.f32 %v517, %v220
        %v520 = vmul.f32 %v517, %v221
        %v524 = vrot.slane %v518, 2
        %v525 = vrot.slane %v519, 2
        %v526 = vsel %vm464, %v524, %v525
        %v527 = vrot.slane %v520, 2
        %v528 = vsel %vm464, %v525, %v527
        %529 = vrot.lane.b32.xlu0 %v526, 125
        %v530 = vpop.permute.xlu0 %529
        %531 = vrot.lane.b32.xlu0 %v528, 125
        %v532 = vpop.permute.xlu0 %531
        %v535 = vadd.f32 %v514, %v530
        %v536 = vadd.f32 %v515, %v532
        %s537 = sld [smem:[#allocation6 + $0x12]]
        %v538 = vstv %s537
        %v539 = vmul.f32 %v538, %v219
        %v540 = vmul.f32 %v538, %v220
        %v541 = vmul.f32 %v538, %v221
        %v545 = vrot.slane %v539, 2
        %v546 = vrot.slane %v540, 2
        %v547 = vsel %vm464, %v545, %v546
        %v548 = vrot.slane %v541, 2
        %v549 = vsel %vm464, %v546, %v548
        %550 = vrot.lane.b32.xlu0 %v547, 124
        %v551 = vpop.permute.xlu0 %550
        %552 = vrot.lane.b32.xlu0 %v549, 124
        %v553 = vpop.permute.xlu0 %552
        %v556 = vadd.f32 %v535, %v551
        %v557 = vadd.f32 %v536, %v553
        %s558 = sld [smem:[#allocation6 + $0x13]]
        %v559 = vstv %s558
        %v560 = vmul.f32 %v559, %v219
        %v561 = vmul.f32 %v559, %v220
        %v562 = vmul.f32 %v559, %v221
        %v566 = vrot.slane %v560, 2
        %v567 = vrot.slane %v561, 2
        %v568 = vsel %vm464, %v566, %v567
        %v569 = vrot.slane %v562, 2
        %v570 = vsel %vm464, %v567, %v569
        %571 = vrot.lane.b32.xlu0 %v568, 123
        %v572 = vpop.permute.xlu0 %571
        %573 = vrot.lane.b32.xlu0 %v570, 123
        %v574 = vpop.permute.xlu0 %573
        %v577 = vadd.f32 %v556, %v572
        %v578 = vadd.f32 %v557, %v574
        %s579 = sld [smem:[#allocation6 + $0x14]]
        %v580 = vstv %s579
        %v581 = vmul.f32 %v580, %v219
        %v582 = vmul.f32 %v580, %v220
        %v583 = vmul.f32 %v580, %v221
        %v587 = vrot.slane %v581, 2
        %v588 = vrot.slane %v582, 2
        %v589 = vsel %vm464, %v587, %v588
        %v590 = vrot.slane %v583, 2
        %v591 = vsel %vm464, %v588, %v590
        %592 = vrot.lane.b32.xlu0 %v589, 122
        %v593 = vpop.permute.xlu0 %592
        %594 = vrot.lane.b32.xlu0 %v591, 122
        %v595 = vpop.permute.xlu0 %594
        %v598 = vadd.f32 %v577, %v593
        %v599 = vadd.f32 %v578, %v595
        %s600 = sld [smem:[#allocation6 + $0x15]]
        %v601 = vstv %s600
        %v602 = vmul.f32 %v601, %v219
        %v603 = vmul.f32 %v601, %v220
        %v604 = vmul.f32 %v601, %v221
        %vm608 = vcmask 1044480
        %v609 = vrot.slane %v602, 3
        %v610 = vrot.slane %v603, 3
        %v611 = vsel %vm608, %v609, %v610
        %v612 = vrot.slane %v604, 3
        %v613 = vsel %vm608, %v610, %v612
        %v616 = vadd.f32 %v598, %v611
        %v617 = vadd.f32 %v599, %v613
        %s618 = sld [smem:[#allocation6 + $0x16]]
        %v619 = vstv %s618
        %v620 = vmul.f32 %v619, %v219
        %v621 = vmul.f32 %v619, %v220
        %v622 = vmul.f32 %v619, %v221
        %v626 = vrot.slane %v620, 3
        %v627 = vrot.slane %v621, 3
        %v628 = vsel %vm608, %v626, %v627
        %v629 = vrot.slane %v622, 3
        %v630 = vsel %vm608, %v627, %v629
        %631 = vrot.lane.b32.xlu0 %v628, 127
        %v632 = vpop.permute.xlu0 %631
        %633 = vrot.lane.b32.xlu0 %v630, 127
        %v634 = vpop.permute.xlu0 %633
        %v637 = vadd.f32 %v616, %v632
        %v638 = vadd.f32 %v617, %v634
        %s639 = sld [smem:[#allocation6 + $0x17]]
        %v640 = vstv %s639
        %v641 = vmul.f32 %v640, %v219
        %v642 = vmul.f32 %v640, %v220
        %v643 = vmul.f32 %v640, %v221
        %v647 = vrot.slane %v641, 3
        %v648 = vrot.slane %v642, 3
        %v649 = vsel %vm608, %v647, %v648
        %v650 = vrot.slane %v643, 3
        %v651 = vsel %vm608, %v648, %v650
        %652 = vrot.lane.b32.xlu0 %v649, 126
        %v653 = vpop.permute.xlu0 %652
        %654 = vrot.lane.b32.xlu0 %v651, 126
        %v655 = vpop.permute.xlu0 %654
        %v658 = vadd.f32 %v637, %v653
        %v659 = vadd.f32 %v638, %v655
        %s660 = sld [smem:[#allocation6 + $0x18]]
        %v661 = vstv %s660
        %v662 = vmul.f32 %v661, %v219
        %v663 = vmul.f32 %v661, %v220
        %v664 = vmul.f32 %v661, %v221
        %v668 = vrot.slane %v662, 3
        %v669 = vrot.slane %v663, 3
        %v670 = vsel %vm608, %v668, %v669
        %v671 = vrot.slane %v664, 3
        %v672 = vsel %vm608, %v669, %v671
        %673 = vrot.lane.b32.xlu0 %v670, 125
        %v674 = vpop.permute.xlu0 %673
        %675 = vrot.lane.b32.xlu0 %v672, 125
        %v676 = vpop.permute.xlu0 %675
        %v679 = vadd.f32 %v658, %v674
        %v680 = vadd.f32 %v659, %v676
        %s681 = sld [smem:[#allocation6 + $0x19]]
        %v682 = vstv %s681
        %v683 = vmul.f32 %v682, %v219
        %v684 = vmul.f32 %v682, %v220
        %v685 = vmul.f32 %v682, %v221
        %v689 = vrot.slane %v683, 3
        %v690 = vrot.slane %v684, 3
        %v691 = vsel %vm608, %v689, %v690
        %v692 = vrot.slane %v685, 3
        %v693 = vsel %vm608, %v690, %v692
        %694 = vrot.lane.b32.xlu0 %v691, 124
        %v695 = vpop.permute.xlu0 %694
        %696 = vrot.lane.b32.xlu0 %v693, 124
        %v697 = vpop.permute.xlu0 %696
        %v700 = vadd.f32 %v679, %v695
        %v701 = vadd.f32 %v680, %v697
        %s702 = sld [smem:[#allocation6 + $0x1a]]
        %v703 = vstv %s702
        %v704 = vmul.f32 %v703, %v219
        %v705 = vmul.f32 %v703, %v220
        %v706 = vmul.f32 %v703, %v221
        %v710 = vrot.slane %v704, 3
        %v711 = vrot.slane %v705, 3
        %v712 = vsel %vm608, %v710, %v711
        %v713 = vrot.slane %v706, 3
        %v714 = vsel %vm608, %v711, %v713
        %715 = vrot.lane.b32.xlu0 %v712, 123
        %v716 = vpop.permute.xlu0 %715
        %717 = vrot.lane.b32.xlu0 %v714, 123
        %v718 = vpop.permute.xlu0 %717
        %v721 = vadd.f32 %v700, %v716
        %v722 = vadd.f32 %v701, %v718
        %s723 = sld [smem:[#allocation6 + $0x1b]]
        %v724 = vstv %s723
        %v725 = vmul.f32 %v724, %v219
        %v726 = vmul.f32 %v724, %v220
        %v727 = vmul.f32 %v724, %v221
        %v731 = vrot.slane %v725, 3
        %v732 = vrot.slane %v726, 3
        %v733 = vsel %vm608, %v731, %v732
        %v734 = vrot.slane %v727, 3
        %v735 = vsel %vm608, %v732, %v734
        %736 = vrot.lane.b32.xlu0 %v733, 122
        %v737 = vpop.permute.xlu0 %736
        %738 = vrot.lane.b32.xlu0 %v735, 122
        %v739 = vpop.permute.xlu0 %738
        %v742 = vadd.f32 %v721, %v737
        %v743 = vadd.f32 %v722, %v739
        %s744 = sld [smem:[#allocation6 + $0x1c]]
        %v745 = vstv %s744
        %v746 = vmul.f32 %v745, %v219
        %v747 = vmul.f32 %v745, %v220
        %v748 = vmul.f32 %v745, %v221
        %vm752 = vcmask 1043456
        %v753 = vrot.slane %v746, 4
        %v754 = vrot.slane %v747, 4
        %v755 = vsel %vm752, %v753, %v754
        %v756 = vrot.slane %v748, 4
        %v757 = vsel %vm752, %v754, %v756
        %v760 = vadd.f32 %v742, %v755
        %v761 = vadd.f32 %v743, %v757
        %s762 = sld [smem:[#allocation6 + $0x1d]]
        %v763 = vstv %s762
        %v764 = vmul.f32 %v763, %v219
        %v765 = vmul.f32 %v763, %v220
        %v766 = vmul.f32 %v763, %v221
        %v770 = vrot.slane %v764, 4
        %v771 = vrot.slane %v765, 4
        %v772 = vsel %vm752, %v770, %v771
        %v773 = vrot.slane %v766, 4
        %v774 = vsel %vm752, %v771, %v773
        %775 = vrot.lane.b32.xlu0 %v772, 127
        %v776 = vpop.permute.xlu0 %775
        %777 = vrot.lane.b32.xlu0 %v774, 127
        %v778 = vpop.permute.xlu0 %777
        %v781 = vadd.f32 %v760, %v776
        %v782 = vadd.f32 %v761, %v778
        %s783 = sld [smem:[#allocation6 + $0x1e]]
        %v784 = vstv %s783
        %v785 = vmul.f32 %v784, %v219
        %v786 = vmul.f32 %v784, %v220
        %v787 = vmul.f32 %v784, %v221
        %v791 = vrot.slane %v785, 4
        %v792 = vrot.slane %v786, 4
        %v793 = vsel %vm752, %v791, %v792
        %v794 = vrot.slane %v787, 4
        %v795 = vsel %vm752, %v792, %v794
        %796 = vrot.lane.b32.xlu0 %v793, 126
        %v797 = vpop.permute.xlu0 %796
        %798 = vrot.lane.b32.xlu0 %v795, 126
        %v799 = vpop.permute.xlu0 %798
        %v802 = vadd.f32 %v781, %v797
        %v803 = vadd.f32 %v782, %v799
        %s804 = sld [smem:[#allocation6 + $0x1f]]
        %v805 = vstv %s804
        %v806 = vmul.f32 %v805, %v219
        %v807 = vmul.f32 %v805, %v220
        %v808 = vmul.f32 %v805, %v221
        %v812 = vrot.slane %v806, 4
        %v813 = vrot.slane %v807, 4
        %v814 = vsel %vm752, %v812, %v813
        %v815 = vrot.slane %v808, 4
        %v816 = vsel %vm752, %v813, %v815
        %817 = vrot.lane.b32.xlu0 %v814, 125
        %v818 = vpop.permute.xlu0 %817
        %819 = vrot.lane.b32.xlu0 %v816, 125
        %v820 = vpop.permute.xlu0 %819
        %v823 = vadd.f32 %v802, %v818
        %v824 = vadd.f32 %v803, %v820
        %s825 = sld [smem:[#allocation6 + $0x20]]
        %v826 = vstv %s825
        %v827 = vmul.f32 %v826, %v219
        %v828 = vmul.f32 %v826, %v220
        %v829 = vmul.f32 %v826, %v221
        %v833 = vrot.slane %v827, 4
        %v834 = vrot.slane %v828, 4
        %v835 = vsel %vm752, %v833, %v834
        %v836 = vrot.slane %v829, 4
        %v837 = vsel %vm752, %v834, %v836
        %838 = vrot.lane.b32.xlu0 %v835, 124
        %v839 = vpop.permute.xlu0 %838
        %840 = vrot.lane.b32.xlu0 %v837, 124
        %v841 = vpop.permute.xlu0 %840
        %v844 = vadd.f32 %v823, %v839
        %v845 = vadd.f32 %v824, %v841
        %s846 = sld [smem:[#allocation6 + $0x21]]
        %v847 = vstv %s846
        %v848 = vmul.f32 %v847, %v219
        %v849 = vmul.f32 %v847, %v220
        %v850 = vmul.f32 %v847, %v221
        %v854 = vrot.slane %v848, 4
        %v855 = vrot.slane %v849, 4
        %v856 = vsel %vm752, %v854, %v855
        %v857 = vrot.slane %v850, 4
        %v858 = vsel %vm752, %v855, %v857
        %859 = vrot.lane.b32.xlu0 %v856, 123
        %v860 = vpop.permute.xlu0 %859
        %861 = vrot.lane.b32.xlu0 %v858, 123
        %v862 = vpop.permute.xlu0 %861
        %v865 = vadd.f32 %v844, %v860
        %v866 = vadd.f32 %v845, %v862
        %s867 = sld [smem:[#allocation6 + $0x22]]
        %v868 = vstv %s867
        %v869 = vmul.f32 %v868, %v219
        %v870 = vmul.f32 %v868, %v220
        %v871 = vmul.f32 %v868, %v221
        %v875 = vrot.slane %v869, 4
        %v876 = vrot.slane %v870, 4
        %v877 = vsel %vm752, %v875, %v876
        %v878 = vrot.slane %v871, 4
        %v879 = vsel %vm752, %v876, %v878
        %880 = vrot.lane.b32.xlu0 %v877, 122
        %v881 = vpop.permute.xlu0 %880
        %882 = vrot.lane.b32.xlu0 %v879, 122
        %v883 = vpop.permute.xlu0 %882
        %v886 = vadd.f32 %v865, %v881
        %v887 = vadd.f32 %v866, %v883
        %s888 = sld [smem:[#allocation6 + $0x23]]
        %v889 = vstv %s888
        %v890 = vmul.f32 %v889, %v219
        %v891 = vmul.f32 %v889, %v220
        %v892 = vmul.f32 %v889, %v221
        %v896 = vrot.slane %v890, 5
        %v897 = vrot.slane %v891, 5
        %v898 = vsel %vm195, %v896, %v897
        %v899 = vrot.slane %v892, 5
        %v900 = vsel %vm195, %v897, %v899
        %v903 = vadd.f32 %v886, %v898
        %v904 = vadd.f32 %v887, %v900
        %s905 = sld [smem:[#allocation6 + $0x24]]
        %v906 = vstv %s905
        %v907 = vmul.f32 %v906, %v219
        %v908 = vmul.f32 %v906, %v220
        %v909 = vmul.f32 %v906, %v221
        %v913 = vrot.slane %v907, 5
        %v914 = vrot.slane %v908, 5
        %v915 = vsel %vm195, %v913, %v914
        %v916 = vrot.slane %v909, 5
        %v917 = vsel %vm195, %v914, %v916
        %918 = vrot.lane.b32.xlu0 %v915, 127
        %v919 = vpop.permute.xlu0 %918
        %920 = vrot.lane.b32.xlu0 %v917, 127
        %v921 = vpop.permute.xlu0 %920
        %v924 = vadd.f32 %v903, %v919
        %v925 = vadd.f32 %v904, %v921
        %s926 = sld [smem:[#allocation6 + $0x25]]
        %v927 = vstv %s926
        %v928 = vmul.f32 %v927, %v219
        %v929 = vmul.f32 %v927, %v220
        %v930 = vmul.f32 %v927, %v221
        %v934 = vrot.slane %v928, 5
        %v935 = vrot.slane %v929, 5
        %v936 = vsel %vm195, %v934, %v935
        %v937 = vrot.slane %v930, 5
        %v938 = vsel %vm195, %v935, %v937
        %939 = vrot.lane.b32.xlu0 %v936, 126
        %v940 = vpop.permute.xlu0 %939
        %941 = vrot.lane.b32.xlu0 %v938, 126
        %v942 = vpop.permute.xlu0 %941
        %v945 = vadd.f32 %v924, %v940
        %v946 = vadd.f32 %v925, %v942
        %s947 = sld [smem:[#allocation6 + $0x26]]
        %v948 = vstv %s947
        %v949 = vmul.f32 %v948, %v219
        %v950 = vmul.f32 %v948, %v220
        %v951 = vmul.f32 %v948, %v221
        %v955 = vrot.slane %v949, 5
        %v956 = vrot.slane %v950, 5
        %v957 = vsel %vm195, %v955, %v956
        %v958 = vrot.slane %v951, 5
        %v959 = vsel %vm195, %v956, %v958
        %960 = vrot.lane.b32.xlu0 %v957, 125
        %v961 = vpop.permute.xlu0 %960
        %962 = vrot.lane.b32.xlu0 %v959, 125
        %v963 = vpop.permute.xlu0 %962
        %v966 = vadd.f32 %v945, %v961
        %v967 = vadd.f32 %v946, %v963
        %s968 = sld [smem:[#allocation6 + $0x27]]
        %v969 = vstv %s968
        %v970 = vmul.f32 %v969, %v219
        %v971 = vmul.f32 %v969, %v220
        %v972 = vmul.f32 %v969, %v221
        %v976 = vrot.slane %v970, 5
        %v977 = vrot.slane %v971, 5
        %v978 = vsel %vm195, %v976, %v977
        %v979 = vrot.slane %v972, 5
        %v980 = vsel %vm195, %v977, %v979
        %981 = vrot.lane.b32.xlu0 %v978, 124
        %v982 = vpop.permute.xlu0 %981
        %983 = vrot.lane.b32.xlu0 %v980, 124
        %v984 = vpop.permute.xlu0 %983
        %v987 = vadd.f32 %v966, %v982
        %v988 = vadd.f32 %v967, %v984
        %s989 = sld [smem:[#allocation6 + $0x28]]
        %v990 = vstv %s989
        %v991 = vmul.f32 %v990, %v219
        %v992 = vmul.f32 %v990, %v220
        %v993 = vmul.f32 %v990, %v221
        %v997 = vrot.slane %v991, 5
        %v998 = vrot.slane %v992, 5
        %v999 = vsel %vm195, %v997, %v998
        %v1000 = vrot.slane %v993, 5
        %v1001 = vsel %vm195, %v998, %v1000
        %1002 = vrot.lane.b32.xlu0 %v999, 123
        %v1003 = vpop.permute.xlu0 %1002
        %1004 = vrot.lane.b32.xlu0 %v1001, 123
        %v1005 = vpop.permute.xlu0 %1004
        %v1008 = vadd.f32 %v987, %v1003
        %v1009 = vadd.f32 %v988, %v1005
        %s1010 = sld [smem:[#allocation6 + $0x29]]
        %v1011 = vstv %s1010
        %v1012 = vmul.f32 %v1011, %v219
        %v1013 = vmul.f32 %v1011, %v220
        %v1014 = vmul.f32 %v1011, %v221
        %v1018 = vrot.slane %v1012, 5
        %v1019 = vrot.slane %v1013, 5
        %v1020 = vsel %vm195, %v1018, %v1019
        %v1021 = vrot.slane %v1014, 5
        %v1022 = vsel %vm195, %v1019, %v1021
        %1023 = vrot.lane.b32.xlu0 %v1020, 122
        %v1024 = vpop.permute.xlu0 %1023
        %1025 = vrot.lane.b32.xlu0 %v1022, 122
        %v1026 = vpop.permute.xlu0 %1025
        %v1029 = vadd.f32 %v1008, %v1024
        %v1030 = vadd.f32 %v1009, %v1026
        %s1031 = sld [smem:[#allocation6 + $0x2a]]
        %v1032 = vstv %s1031
        %v1033 = vmul.f32 %v1032, %v219
        %v1034 = vmul.f32 %v1032, %v220
        %v1035 = vmul.f32 %v1032, %v221
        %vm1039 = vcmask 1041408
        %v1040 = vrot.slane %v1033, 6
        %v1041 = vrot.slane %v1034, 6
        %v1042 = vsel %vm1039, %v1040, %v1041
        %v1043 = vrot.slane %v1035, 6
        %v1044 = vsel %vm1039, %v1041, %v1043
        %v1047 = vadd.f32 %v1029, %v1042
        %v1048 = vadd.f32 %v1030, %v1044
        %s1049 = sld [smem:[#allocation6 + $0x2b]]
        %v1050 = vstv %s1049
        %v1051 = vmul.f32 %v1050, %v219
        %v1052 = vmul.f32 %v1050, %v220
        %v1053 = vmul.f32 %v1050, %v221
        %v1057 = vrot.slane %v1051, 6
        %v1058 = vrot.slane %v1052, 6
        %v1059 = vsel %vm1039, %v1057, %v1058
        %v1060 = vrot.slane %v1053, 6
        %v1061 = vsel %vm1039, %v1058, %v1060
        %1062 = vrot.lane.b32.xlu0 %v1059, 127
        %v1063 = vpop.permute.xlu0 %1062
        %1064 = vrot.lane.b32.xlu0 %v1061, 127
        %v1065 = vpop.permute.xlu0 %1064
        %v1068 = vadd.f32 %v1047, %v1063
        %v1069 = vadd.f32 %v1048, %v1065
        %s1070 = sld [smem:[#allocation6 + $0x2c]]
        %v1071 = vstv %s1070
        %v1072 = vmul.f32 %v1071, %v219
        %v1073 = vmul.f32 %v1071, %v220
        %v1074 = vmul.f32 %v1071, %v221
        %v1078 = vrot.slane %v1072, 6
        %v1079 = vrot.slane %v1073, 6
        %v1080 = vsel %vm1039, %v1078, %v1079
        %v1081 = vrot.slane %v1074, 6
        %v1082 = vsel %vm1039, %v1079, %v1081
        %1083 = vrot.lane.b32.xlu0 %v1080, 126
        %v1084 = vpop.permute.xlu0 %1083
        %1085 = vrot.lane.b32.xlu0 %v1082, 126
        %v1086 = vpop.permute.xlu0 %1085
        %v1089 = vadd.f32 %v1068, %v1084
        %v1090 = vadd.f32 %v1069, %v1086
        %s1091 = sld [smem:[#allocation6 + $0x2d]]
        %v1092 = vstv %s1091
        %v1093 = vmul.f32 %v1092, %v219
        %v1094 = vmul.f32 %v1092, %v220
        %v1095 = vmul.f32 %v1092, %v221
        %v1099 = vrot.slane %v1093, 6
        %v1100 = vrot.slane %v1094, 6
        %v1101 = vsel %vm1039, %v1099, %v1100
        %v1102 = vrot.slane %v1095, 6
        %v1103 = vsel %vm1039, %v1100, %v1102
        %1104 = vrot.lane.b32.xlu0 %v1101, 125
        %v1105 = vpop.permute.xlu0 %1104
        %1106 = vrot.lane.b32.xlu0 %v1103, 125
        %v1107 = vpop.permute.xlu0 %1106
        %v1110 = vadd.f32 %v1089, %v1105
        %v1111 = vadd.f32 %v1090, %v1107
        %s1112 = sld [smem:[#allocation6 + $0x2e]]
        %v1113 = vstv %s1112
        %v1114 = vmul.f32 %v1113, %v219
        %v1115 = vmul.f32 %v1113, %v220
        %v1116 = vmul.f32 %v1113, %v221
        %v1120 = vrot.slane %v1114, 6
        %v1121 = vrot.slane %v1115, 6
        %v1122 = vsel %vm1039, %v1120, %v1121
        %v1123 = vrot.slane %v1116, 6
        %v1124 = vsel %vm1039, %v1121, %v1123
        %1125 = vrot.lane.b32.xlu0 %v1122, 124
        %v1126 = vpop.permute.xlu0 %1125
        %1127 = vrot.lane.b32.xlu0 %v1124, 124
        %v1128 = vpop.permute.xlu0 %1127
        %v1131 = vadd.f32 %v1110, %v1126
        %v1132 = vadd.f32 %v1111, %v1128
        %s1133 = sld [smem:[#allocation6 + $0x2f]]
        %v1134 = vstv %s1133
        %v1135 = vmul.f32 %v1134, %v219
        %v1136 = vmul.f32 %v1134, %v220
        %v1137 = vmul.f32 %v1134, %v221
        %v1141 = vrot.slane %v1135, 6
        %v1142 = vrot.slane %v1136, 6
        %v1143 = vsel %vm1039, %v1141, %v1142
        %v1144 = vrot.slane %v1137, 6
        %v1145 = vsel %vm1039, %v1142, %v1144
        %1146 = vrot.lane.b32.xlu0 %v1143, 123
        %v1147 = vpop.permute.xlu0 %1146
        %1148 = vrot.lane.b32.xlu0 %v1145, 123
        %v1149 = vpop.permute.xlu0 %1148
        %v1152 = vadd.f32 %v1131, %v1147
        %v1153 = vadd.f32 %v1132, %v1149
        %s1154 = sld [smem:[#allocation6 + $0x30]]
        %v1155 = vstv %s1154
        %v1156 = vmul.f32 %v1155, %v219
        %v1157 = vmul.f32 %v1155, %v220
        %v1158 = vmul.f32 %v1155, %v221
        %v1162 = vrot.slane %v1156, 6
        %v1163 = vrot.slane %v1157, 6
        %v1164 = vsel %vm1039, %v1162, %v1163
        %v1165 = vrot.slane %v1158, 6
        %v1166 = vsel %vm1039, %v1163, %v1165
        %1167 = vrot.lane.b32.xlu0 %v1164, 122
        %v1168 = vpop.permute.xlu0 %1167
        %1169 = vrot.lane.b32.xlu0 %v1166, 122
        %v1170 = vpop.permute.xlu0 %1169
        %v1173 = vadd.f32 %v1152, %v1168
        %v1174 = vadd.f32 %v1153, %v1170
        %v1175 = vsub.f32 0.0, %v1173
        %v1176 = vsub.f32 0.0, %v1174
        %v1177 = vmul.f32 %v1175, 1.442695
        %v1178 = vpow.pop %v1177
        %v1179 = vmul.f32 %v1176, 1.442695
        %v1180 = vpow.pop %v1179
        %v1181 = vadd.f32 %v1178, 1.0
        %v1182 = vadd.f32 %v1180, 1.0
        %v1183 = vrcp.pop %v1181
        %v1184 = vmul.f32 1.0, %v1183
        %v1185 = vrcp.pop %v1182
        %v1186 = vmul.f32 1.0, %v1185
        %vm1187 = vcmask 130048
        %1188 = vst.msk [vmem:[%s175] sm:$0xff] %vm1187, %v1184
        %1189 = vst.msk [vmem:[%s175 + $0x8] sm:$0xff] %vm1187, %v1186
        %s1190 = sand.u32 %s75, 1
        %s1191 = scalar_lea.sflag [#allocation4], %s1190
        %s1192 = sand.u32 %s75, 1
        %s1193 = smul.addr %s1192, 16
        %s1194 = scalar_lea.vmem [#allocation7], %s1193
        // Predicated region
        $region37: #{tpu_custom_call.1} parent=27 // pred_check
          %p1195 = pneg %p85
        $region38: #{tpu_custom_call.1} parent=27 // pred_check_branch
          %1197 = sbr.rel (%p1195) target = $region40
        $region39: #{tpu_custom_call.1} parent=27 // pred_region
          %s1199 = ssub.s32 256, 256
          %1200 = vsyncadd %s1191, %s1199
          %s1201 = smul.addr %s20, 2
          %s1202 = smul.addr %s1201, 128
          %s1203 = scalar_lea.hbm %s2, %s1202
          %s1204 = sshll.u32 %s1194, 4
          %s1205 = int_to_ptr.vmem [resolvable:$true] %s1204
          %1210 = dma.vmem_to_hbm [thread:$0]  %s1205, 256, %s1203, %s1191, 128, 128, 8
        $region40: #{tpu_custom_call.1} parent=27 // pred_fallthru
          _
      $region28: #{tpu_custom_call.1} parent=5 // pred_fallthru
        _
      %p1211 = scmp.le.s32.totalorder 2, %s15
      // Predicated region
      $region41: #{tpu_custom_call.1} parent=5 // pred_check
        %p1212 = pneg %p1211
      $region42: #{tpu_custom_call.1} parent=5 // pred_check_branch
        %1214 = sbr.rel (%p1212) target = $region44
      $region43: #{tpu_custom_call.1} parent=5 // pred_region
        %s1215 = ssub.s32 %s15, 2
        // Predicated region
        $region45: #{tpu_custom_call.1} parent=43 // pred_check
          %p1216 = pneg %p91
        $region46: #{tpu_custom_call.1} parent=43 // pred_check_branch
          %1218 = sbr.rel (%p1216) target = $region48
        $region47: #{tpu_custom_call.1} parent=43 // pred_region
          %s1219 = sand.u32 %s76, 1
          %s1220 = scalar_lea.sflag [#allocation4], %s1219
          %s1221 = sand.u32 %s76, 1
          %s1222 = smul.addr %s1221, 16
          %s1223 = scalar_lea.vmem [#allocation7], %s1222
          %1224 = dma.done %s1220, 256
        $region48: #{tpu_custom_call.1} parent=43 // pred_fallthru
          _
      $region44: #{tpu_custom_call.1} parent=5 // pred_fallthru
        _
    $region6: #{tpu_custom_call.1} parent=1 // loop_footer
      %s19 = sadd.s32 1, %s15
    $region7: #{tpu_custom_call.1} parent=1 // loop_footer_branch
      %14 = sbr.rel target = $region3
    $region8: #{tpu_custom_call.1} parent=1 // loop_exit
      _
    %1225 = vsyncpa [#allocation3], 1
    %s1226 = scalar_lea.sflag [#allocation3], 1
    %1227 = vsyncpa %s1226, 1
    %1228 = vsyncpa [#allocation4], 1
    %s1229 = scalar_lea.sflag [#allocation4], 1
    %1230 = vsyncpa %s1229, 1
    %1231 = vsyncpa [#allocation5], 1
    %s1232 = scalar_lea.sflag [#allocation5], 1
    %1233 = vsyncpa %s1232, 1

</llo_original>
